<compile_context>
chip_gen: v6e
topology: v6e:2x2x1
jax: 0.10.0
libtpu: 0.0.40
codegen_flags: <defaults>
</compile_context>

<pallas_src>
import jax
import jax.numpy as jnp
import numpy as np
from jax.experimental import pallas as pl
from jax.experimental.pallas import tpu as pltpu


def _round_up(x, m):
    return (x + m - 1) // m * m


# --------------------------------------------------------------------------- kernel
def _stack_kernel(x_ref, film_ref, w1_ref, w2_ref, b_ref, o_ref):
    """One FiLM residual-MLP layer applied to the resident activation tile.

    The output block index is constant across the layer grid axis, so o_ref is the
    layer-resident float32 accumulator (no extra scratch, no final copy).
    """
    l = pl.program_id(1)

    # Load the token tile into the resident output/accumulator once per token tile.
    @pl.when(l == 0)
    def _():
        o_ref[...] = x_ref[...].astype(jnp.float32)

    x = o_ref[...]                      # (t_tile, Dp) f32, resident across all layers
    scale = film_ref[0, 0]              # (t_tile, Dp) f32
    shift = film_ref[0, 1]              # (t_tile, Dp) f32
    b1 = b_ref[0, 0:1]                  # (1, Dp) f32
    b2 = b_ref[0, 1:2]                  # (1, Dp) f32

    # Linear_1 (bf16 weights, f32 MXU accumulation) + GELU + FiLM (f32 elementwise).
    h = jnp.dot(x.astype(w1_ref.dtype), w1_ref[0],
                preferred_element_type=jnp.float32) + b1
    h = jax.nn.gelu(h, approximate=True)
    h = h * (1.0 + scale) + shift

    # Linear_2 + residual, written back into the resident accumulator.
    h = jnp.dot(h.astype(w2_ref.dtype), w2_ref[0],
                preferred_element_type=jnp.float32) + b2
    o_ref[...] = x + h
    # HBM writeback happens automatically when the token-tile block index changes.


# --------------------------------------------------------------------------- wrapper
def prepare_stack_params(params, *, weight_dtype=jnp.bfloat16):
    """One-time pad + cast of the stacked weights (hoisted out of the per-call path)."""
    w1, b1, w2, b2 = params["w1"], params["b1"], params["w2"], params["b2"]
    L, D, _ = w1.shape
    Dp = _round_up(D, 128)
    pd = Dp - D
    w1_p = jnp.pad(w1, ((0, 0), (0, pd), (0, pd))).astype(weight_dtype)   # (L, Dp, Dp)
    w2_p = jnp.pad(w2, ((0, 0), (0, pd), (0, pd))).astype(weight_dtype)   # (L, Dp, Dp)
    b_p = jnp.stack([jnp.pad(b1, ((0, 0), (0, pd))),
                     jnp.pad(b2, ((0, 0), (0, pd)))], axis=1)             # (L, 2, Dp) f32
    return dict(w1=w1_p, w2=w2_p, b=b_p, wc=params["wc"], bc=params["bc"])


def decoder_layer_stack(x, cond, t, prepared, *, max_t_tile=512):
    """Equivalent of DecoderLayerStack.forward, fused into a single pallas_call."""
    B, S, D = x.shape
    w1_p, w2_p, b_p = prepared["w1"], prepared["w2"], prepared["b"]
    wc, bc = prepared["wc"], prepared["bc"]
    L, Dp, _ = w1_p.shape
    pd = Dp - D
    w_bytes = jnp.dtype(w1_p.dtype).itemsize

    # ---- FiLM hoisted out of the kernel: film[l, b] = concat(cond, t)[b] @ Wc[l] + bc[l]
    cond_t = jnp.concatenate([cond, t], axis=-1)                          # (B, Dct)
    film = jnp.einsum("bc,lcd->lbd", cond_t, wc) + bc[:, None, :]         # (L, B, 2D) f32
    scale, shift = film[..., :D], film[..., D:]                           # (L, B, D)

    # ---- fold (B, S) into one token axis so matmul M is as large as possible
    T = B * S
    scale_tok = jnp.broadcast_to(scale[:, :, None, :], (L, B, S, D)).reshape(L, T, D)
    shift_tok = jnp.broadcast_to(shift[:, :, None, :], (L, B, S, D)).reshape(L, T, D)
    film_tok = jnp.stack([scale_tok, shift_tok], axis=1)                  # (L, 2, T, D)

    # ---- per-generation VMEM budget and token-tile selection
    try:
        vmem_cap = int(pltpu.get_tpu_info().vmem_capacity_bytes)
    except Exception:
        vmem_cap = 128 * 1024 * 1024
    # headroom: ~56 MiB usable on v7x (64 MiB physical), ~112 MiB on 128 MiB parts.
    vmem_budget = vmem_cap - max(vmem_cap // 8, 8 * 1024 * 1024)

    def vmem_est(tt):
        act = 8 * tt * Dp * 4               # x + out + (scale,shift) blocks, 2x buffered
        wts = 4 * Dp * Dp * w_bytes         # W1 + W2, double-buffered
        return act + wts + 4 * 2 * Dp * 4   # merged bias block

    t_tile = min(_round_up(T, 8), max_t_tile)
    while t_tile > 8 and vmem_est(t_tile) > vmem_budget:
        t_tile = max(8, _round_up(t_tile // 2, 8))

    Tp = _round_up(T, t_tile)
    pt = Tp - T
    n_tok_tiles = Tp // t_tile

    # ---- lane/sublane-dense padding (column padding is exact; padded rows sliced off)
    x_tok = jnp.pad(x.reshape(T, D), ((0, pt), (0, pd)))                  # (Tp, Dp) f32
    film_pk = jnp.pad(film_tok, ((0, 0), (0, 0), (0, pt), (0, pd)))       # (L, 2, Tp, Dp)

    vmem_limit = int(min(max(2 * vmem_est(t_tile), 32 * 1024 * 1024), vmem_budget))

    cost = pl.CostEstimate(
        flops=int(4 * Tp * Dp * Dp * L),
        transcendentals=int(Tp * Dp * L),
        bytes_accessed=int(2 * Tp * Dp * 4                                   # x in + out
                           + n_tok_tiles * L * (2 * Dp * Dp * w_bytes        # weights (re-streamed)
                                                + 2 * Dp * 4)                # biases
                           + L * 2 * Tp * Dp * 4),                           # FiLM rows
    )

    out = pl.pallas_call(
        _stack_kernel,
        out_shape=jax.ShapeDtypeStruct((Tp, Dp), jnp.float32),
        grid_spec=pltpu.PrefetchScalarGridSpec(
            num_scalar_prefetch=0,
            grid=(n_tok_tiles, L),
            in_specs=[
                pl.BlockSpec((t_tile, Dp), lambda i, l: (i, 0)),          # x tokens
                pl.BlockSpec((1, 2, t_tile, Dp), lambda i, l: (l, 0, i, 0)),  # scale|shift
                pl.BlockSpec((1, Dp, Dp), lambda i, l: (l, 0, 0)),        # W1
                pl.BlockSpec((1, Dp, Dp), lambda i, l: (l, 0, 0)),        # W2
                pl.BlockSpec((1, 2, Dp), lambda i, l: (l, 0, 0)),         # b1|b2
            ],
            out_specs=pl.BlockSpec((t_tile, Dp), lambda i, l: (i, 0)),
        ),
        compiler_params=pltpu.CompilerParams(
            dimension_semantics=("parallel", "arbitrary"),
            vmem_limit_bytes=vmem_limit),
        cost_estimate=cost,
        input_output_aliases={0: 0},   # residual stack overwrites the padded x buffer
    )(x_tok, film_pk, w1_p, w2_p, b_p)

    return out[:T, :D].reshape(B, S, D).astype(x.dtype)


# --------------------------------------------------------------------------- reference / params
def init_stack_params(key, n_layers, d_model, d_cond_t):
    """Deterministic synthetic parameters, stacked along a leading layer axis."""
    w1s, w2s, wcs = [], [], []
    for i in range(n_layers):
        k = jax.random.fold_in(key, i)
        k1, k2, k3 = jax.random.split(k, 3)
        w1s.append(0.1 * jax.random.normal(k1, (d_model, d_model), jnp.float32))
        w2s.append(0.1 * jax.random.normal(k2, (d_model, d_model), jnp.float32))
        wcs.append(0.1 * jax.random.normal(k3, (d_cond_t, 2 * d_model), jnp.float32))
    return dict(
        w1=jnp.stack(w1s), b1=jnp.zeros((n_layers, d_model), jnp.float32),
        w2=jnp.stack(w2s), b2=jnp.zeros((n_layers, d_model), jnp.float32),
        wc=jnp.stack(wcs), bc=jnp.zeros((n_layers, 2 * d_model), jnp.float32))


def _reference(x, cond, t, params):
    """Pure-JAX fp32 reference of the same layer stack."""
    D = x.shape[-1]
    cond_t = jnp.concatenate([cond, t], axis=-1)
    out = x
    for l in range(params["w1"].shape[0]):
        film = cond_t @ params["wc"][l] + params["bc"][l]
        scale, shift = film[:, None, :D], film[:, None, D:]
        h = jax.nn.gelu(out @ params["w1"][l] + params["b1"][l], approximate=True)
        h = h * (1.0 + scale) + shift
        h = h @ params["w2"][l] + params["b2"][l]
        out = out + h
    return out


if __name__ == "__main__":
    B, S, D = 2, 8, 32        # batch, seq, hidden
    Dc, Dt = 16, 8            # cond dim, timestep-embedding dim
    n_layers = 3

    key = jax.random.PRNGKey(0)
    kx, kc, kt, kp = jax.random.split(key, 4)
    x = jax.random.normal(kx, (B, S, D), jnp.float32)
    cond = jax.random.normal(kc, (B, Dc), jnp.float32)
    t = jax.random.normal(kt, (B, Dt), jnp.float32)

    params = init_stack_params(kp, n_layers, D, Dc + Dt)
    prepared = prepare_stack_params(params)   # one-time pad + bf16 cast, outside jit

    fwd = jax.jit(decoder_layer_stack)
    out = jax.block_until_ready(fwd(x, cond, t, prepared))

    assert out.shape == (B, S, D) and out.dtype == jnp.float32
    assert bool(jnp.all(jnp.isfinite(out)))
    ref = _reference(x, cond, t, params)
    np.testing.assert_allclose(np.asarray(out), np.asarray(ref), rtol=5e-2, atol=5e-2)
    print("KERNEL_OK")
</pallas_src>

<mosaic_0001>
module attributes {stable_mosaic.version = 11 : i64} {
  func.func @_stack_kernel(%arg0: i32, %arg1: i32, %arg2: memref<16x128xf32, #tpu.memory_space<vmem>>, %arg3: memref<1x2x16x128xf32, #tpu.memory_space<vmem>>, %arg4: memref<1x128x128xbf16, #tpu.memory_space<vmem>>, %arg5: memref<1x128x128xbf16, #tpu.memory_space<vmem>>, %arg6: memref<1x2x128xf32, #tpu.memory_space<vmem>>, %arg7: memref<16x128xf32, #tpu.memory_space<vmem>>) attributes {dimension_semantics = [#tpu.dimension_semantics<parallel>, #tpu.dimension_semantics<arbitrary>], iteration_bounds = array<i64: 1, 3>, scalar_prefetch = 0 : i64, scratch_operands = 0 : i64, tpu.core_type = #tpu.core_type<tc>, window_params = [{transform_indices = @transform_0, window_bounds = array<i64: 16, 128>}, {transform_indices = @transform_1, window_bounds = array<i64: 1, 2, 16, 128>}, {transform_indices = @transform_2, window_bounds = array<i64: 1, 128, 128>}, {transform_indices = @transform_3, window_bounds = array<i64: 1, 128, 128>}, {transform_indices = @transform_4, window_bounds = array<i64: 1, 2, 128>}, {transform_indices = @transform_5, window_bounds = array<i64: 16, 128>}]} {
    %c0_i32 = arith.constant 0 : i32
    %0 = arith.cmpi eq, %arg1, %c0_i32 : i32
    %1 = arith.extui %0 : i1 to i32
    %c0_i32_0 = arith.constant 0 : i32
    %2 = arith.cmpi ne, %1, %c0_i32_0 : i32
    scf.if %2 {
      %c0_29 = arith.constant 0 : index
      %c0_30 = arith.constant 0 : index
      %43 = vector.load %arg2[%c0_29, %c0_30] : memref<16x128xf32, #tpu.memory_space<vmem>>, vector<16x128xf32>
      %c0_31 = arith.constant 0 : index
      %c0_32 = arith.constant 0 : index
      %44 = vector.load %arg7[%c0_31, %c0_32] : memref<16x128xf32, #tpu.memory_space<vmem>>, vector<16x128xf32>
      tpu.vector_store %arg7[%c0_31, %c0_32], %43 {strides = array<i32>} : memref<16x128xf32, #tpu.memory_space<vmem>>, vector<16x128xf32>,
    } else {
    }
    %c0 = arith.constant 0 : index
    %c0_1 = arith.constant 0 : index
    %3 = vector.load %arg7[%c0, %c0_1] : memref<16x128xf32, #tpu.memory_space<vmem>>, vector<16x128xf32>
    %c0_2 = arith.constant 0 : index
    %c0_3 = arith.constant 0 : index
    %c0_4 = arith.constant 0 : index
    %c0_5 = arith.constant 0 : index
    %4 = vector.load %arg3[%c0_2, %c0_3, %c0_4, %c0_5] : memref<1x2x16x128xf32, #tpu.memory_space<vmem>>, vector<1x1x16x128xf32>
    %5 = vector.shape_cast %4 : vector<1x1x16x128xf32> to vector<16x128xf32>
    %c0_6 = arith.constant 0 : index
    %c1 = arith.constant 1 : index
    %c0_7 = arith.constant 0 : index
    %c0_8 = arith.constant 0 : index
    %6 = vector.load %arg3[%c0_6, %c1, %c0_7, %c0_8] : memref<1x2x16x128xf32, #tpu.memory_space<vmem>>, vector<1x1x16x128xf32>
    %7 = vector.shape_cast %6 : vector<1x1x16x128xf32> to vector<16x128xf32>
    %c0_9 = arith.constant 0 : index
    %c0_10 = arith.constant 0 : index
    %c0_11 = arith.constant 0 : index
    %8 = vector.load %arg6[%c0_9, %c0_10, %c0_11] : memref<1x2x128xf32, #tpu.memory_space<vmem>>, vector<1x1x128xf32>
    %9 = vector.shape_cast %8 : vector<1x1x128xf32> to vector<1x128xf32>
    %c0_12 = arith.constant 0 : index
    %c1_13 = arith.constant 1 : index
    %c0_14 = arith.constant 0 : index
    %10 = vector.load %arg6[%c0_12, %c1_13, %c0_14] : memref<1x2x128xf32, #tpu.memory_space<vmem>>, vector<1x1x128xf32>
    %11 = vector.shape_cast %10 : vector<1x1x128xf32> to vector<1x128xf32>
    %12 = arith.truncf %3 : vector<16x128xf32> to vector<16x128xbf16>
    %c0_15 = arith.constant 0 : index
    %c0_16 = arith.constant 0 : index
    %c0_17 = arith.constant 0 : index
    %13 = vector.load %arg4[%c0_15, %c0_16, %c0_17] : memref<1x128x128xbf16, #tpu.memory_space<vmem>>, vector<1x128x128xbf16>
    %14 = vector.shape_cast %13 : vector<1x128x128xbf16> to vector<128x128xbf16>
    %cst = arith.constant dense<0.000000e+00> : vector<16x128xf32>
    %15 = tpu.matmul %12, %14, %cst {dimension_numbers = #tpu.dot_dimension_numbers<[1], [0], [0], [1], [0, 0, 1, 1], [], []>} : vector<16x128xbf16>, vector<128x128xbf16>, vector<16x128xf32> -> vector<16x128xf32>
    %16 = vector.broadcast %9 : vector<1x128xf32> to vector<16x128xf32>
    %17 = arith.addf %15, %16 : vector<16x128xf32>
    %18 = arith.mulf %17, %17 : vector<16x128xf32>
    %19 = arith.mulf %17, %18 : vector<16x128xf32>
    %cst_18 = arith.constant 4.471500e-02 : f32
    %20 = vector.broadcast %cst_18 : f32 to vector<16x128xf32>
    %21 = arith.mulf %20, %19 : vector<16x128xf32>
    %22 = arith.addf %17, %21 : vector<16x128xf32>
    %cst_19 = arith.constant 0.797884583 : f32
    %23 = vector.broadcast %cst_19 : f32 to vector<16x128xf32>
    %24 = arith.mulf %23, %22 : vector<16x128xf32>
    %25 = math.tanh %24 : vector<16x128xf32>
    %cst_20 = arith.constant 1.000000e+00 : f32
    %26 = vector.broadcast %cst_20 : f32 to vector<16x128xf32>
    %27 = arith.addf %26, %25 : vector<16x128xf32>
    %cst_21 = arith.constant 5.000000e-01 : f32
    %28 = vector.broadcast %cst_21 : f32 to vector<16x128xf32>
    %29 = arith.mulf %28, %27 : vector<16x128xf32>
    %30 = arith.mulf %17, %29 : vector<16x128xf32>
    %cst_22 = arith.constant 1.000000e+00 : f32
    %31 = vector.broadcast %cst_22 : f32 to vector<16x128xf32>
    %32 = arith.addf %31, %5 : vector<16x128xf32>
    %33 = arith.mulf %30, %32 : vector<16x128xf32>
    %34 = arith.addf %33, %7 : vector<16x128xf32>
    %35 = arith.truncf %34 : vector<16x128xf32> to vector<16x128xbf16>
    %c0_23 = arith.constant 0 : index
    %c0_24 = arith.constant 0 : index
    %c0_25 = arith.constant 0 : index
    %36 = vector.load %arg5[%c0_23, %c0_24, %c0_25] : memref<1x128x128xbf16, #tpu.memory_space<vmem>>, vector<1x128x128xbf16>
    %37 = vector.shape_cast %36 : vector<1x128x128xbf16> to vector<128x128xbf16>
    %cst_26 = arith.constant dense<0.000000e+00> : vector<16x128xf32>
    %38 = tpu.matmul %35, %37, %cst_26 {dimension_numbers = #tpu.dot_dimension_numbers<[1], [0], [0], [1], [0, 0, 1, 1], [], []>} : vector<16x128xbf16>, vector<128x128xbf16>, vector<16x128xf32> -> vector<16x128xf32>
    %39 = vector.broadcast %11 : vector<1x128xf32> to vector<16x128xf32>
    %40 = arith.addf %38, %39 : vector<16x128xf32>
    %41 = arith.addf %3, %40 : vector<16x128xf32>
    %c0_27 = arith.constant 0 : index
    %c0_28 = arith.constant 0 : index
    %42 = vector.load %arg7[%c0_27, %c0_28] : memref<16x128xf32, #tpu.memory_space<vmem>>, vector<16x128xf32>
    tpu.vector_store %arg7[%c0_27, %c0_28], %41 {strides = array<i32>} : memref<16x128xf32, #tpu.memory_space<vmem>>, vector<16x128xf32>,
    return
  }
  func.func @transform_0(%arg0: i32, %arg1: i32) -> (i32, i32) {
    %c0_i32 = arith.constant 0 : i32
    %c0_i32_0 = arith.constant 0 : i32
    return %arg0, %c0_i32 : i32, i32
  }
  func.func @transform_1(%arg0: i32, %arg1: i32) -> (i32, i32, i32, i32) {
    %c0_i32 = arith.constant 0 : i32
    %c0_i32_0 = arith.constant 0 : i32
    %c0_i32_1 = arith.constant 0 : i32
    return %arg1, %c0_i32, %arg0, %c0_i32_0 : i32, i32, i32, i32
  }
  func.func @transform_2(%arg0: i32, %arg1: i32) -> (i32, i32, i32) {
    %c0_i32 = arith.constant 0 : i32
    %c0_i32_0 = arith.constant 0 : i32
    %c0_i32_1 = arith.constant 0 : i32
    return %arg1, %c0_i32, %c0_i32_0 : i32, i32, i32
  }
  func.func @transform_3(%arg0: i32, %arg1: i32) -> (i32, i32, i32) {
    %c0_i32 = arith.constant 0 : i32
    %c0_i32_0 = arith.constant 0 : i32
    %c0_i32_1 = arith.constant 0 : i32
    return %arg1, %c0_i32, %c0_i32_0 : i32, i32, i32
  }
  func.func @transform_4(%arg0: i32, %arg1: i32) -> (i32, i32, i32) {
    %c0_i32 = arith.constant 0 : i32
    %c0_i32_0 = arith.constant 0 : i32
    %c0_i32_1 = arith.constant 0 : i32
    return %arg1, %c0_i32, %c0_i32_0 : i32, i32, i32
  }
  func.func @transform_5(%arg0: i32, %arg1: i32) -> (i32, i32) {
    %c0_i32 = arith.constant 0 : i32
    %c0_i32_0 = arith.constant 0 : i32
    return %arg0, %c0_i32 : i32, i32
  }
}

</mosaic_0001>

<llo_original>
// kernel: decoder_layer_stack.1
$region0: #{decoder_layer_stack.1}
  #allocation0 [shape = 'u32[]', space=smem, size = 0x4, offset = 0x4, fixed_abs, tag = 'smem constant byte address 0x4 - core index']
  #allocation1 [shape = 'u32[144,128]{1,0:T(1,128)}', space=vmem, size = 0x12000, scoped, tag = 'internal scratch']
  %s0 = inlined_call_operand.vmem [shape: f32[16,128], index: 0, kind: input, shape index: {}, may-alias: {0,5}]
  %s1 = inlined_call_operand.vmem [shape: f32[3,2,16,128], index: 1, kind: input, shape index: {}]
  %s2 = inlined_call_operand.vmem [shape: bf16[3,128,128], index: 2, kind: input, shape index: {}]
  %s3 = inlined_call_operand.vmem [shape: bf16[3,128,128], index: 3, kind: input, shape index: {}]
  %s4 = inlined_call_operand.vmem [shape: f32[3,2,128], index: 4, kind: input, shape index: {}]
  %s5 = inlined_call_operand.vmem [shape: f32[16,128], index: 5, kind: output, shape index: {}, may-alias: {0,5}]
  %s6 = sld [smem:[#allocation0]]
  $region57: #{decoder_layer_stack.1} parent=0
    _
  %s8 = ssub.s32 1, %s6
  %s9 = scalar_select 0, %s8, %s6
  loop: start=0, step=1, limit=5
  $region2: #{decoder_layer_stack.1} parent=0 // loop_pre_header
    _
  $region3: #{decoder_layer_stack.1} parent=0 // loop_header
    %s11 = sphi 0, %s15
    %p12 = scmp.ge.s32.totalorder %s11, 5
    %s18 = sphi 0, %s30
    %s19 = sphi 0, %s26
    %s20 = sphi 0, %s18
    %s21 = sphi 0, %s19
    %s22 = sphi 0, %s20
    %s23 = sphi 0, %s21
    %s33 = sphi 0, %s35
    %s36 = sphi 0, %s33
    %s37 = sphi 0, %s36
    %s53 = sphi 0, %s37
    %s61 = sphi 0, %s63
    %s64 = sphi 0, %s61
    %s65 = sphi 0, %s64
    %s81 = sphi 0, %s65
    %s87 = sphi 0, %s89
    %s90 = sphi 0, %s87
    %s91 = sphi 0, %s90
    %s107 = sphi 0, %s91
    %s113 = sphi 0, %s115
    %s116 = sphi 0, %s113
    %s117 = sphi 0, %s116
    %s133 = sphi 0, %s117
    %s139 = sphi 0, %s141
    %s142 = sphi 0, %s139
    %s143 = sphi 0, %s142
    %s159 = sphi 0, %s143
    %s165 = sphi 0, %s167
    %s168 = sphi 0, %s165
    %s169 = sphi 0, %s168
    %s185 = sphi 0, %s169
  $region4: #{decoder_layer_stack.1} parent=0 // loop_header_branch
    %14 = sbr.rel (%p12) target = $region8
  $region5: #{decoder_layer_stack.1} parent=0 // loop_body
    %s16 = ssub.s32 %s11, 1
    %s17 = ssub.s32 %s11, 2
    %s24 = sadd.s32 1, %s19
    %p25 = scmp.ge.s32.totalorder %s24, 3
    %s26 = scalar_select %p25, 0, %s24
    %s27 = sadd.s32 1, %s18
    %s28 = scalar_select %p25, %s27, %s18
    %p29 = scmp.ge.s32.totalorder %s28, 1
    %s30 = scalar_select %p29, 0, %s28
    %s31 = ssub.s32 %s18, %s30
    %p32 = scmp.eq.s32.totalorder %s31, 0
    %s34 = sadd.s32 %s33, 1
    %s35 = scalar_select %p32, %s33, %s34
    %p38 = pneg %p32
    %p39 = scmp.eq.s32.totalorder %s11, 2
    %p40 = por %p38, %p39
    %p41 = scmp.ne.s32.totalorder %s33, %s36
    %p42 = scmp.eq.s32.totalorder %s11, 0
    %p43 = por %p41, %p42
    %p44 = scmp.ne.s32.totalorder %s33, %s36
    %p45 = scmp.eq.s32.totalorder %s16, 2
    %p46 = por %p44, %p45
    %p47 = scmp.ne.s32.totalorder %s36, %s37
    %p48 = scmp.eq.s32.totalorder %s16, 0
    %p49 = por %p47, %p48
    %p50 = scmp.ne.s32.totalorder %s36, %s37
    %p51 = scmp.eq.s32.totalorder %s17, 2
    %p52 = por %p50, %p51
    %p54 = scmp.ne.s32.totalorder %s37, %s53
    %p55 = scmp.eq.s32.totalorder %s17, 0
    %p56 = por %p54, %p55
    %s57 = ssub.s32 %s19, %s26
    %s58 = ssub.s32 %s18, %s30
    %s59 = sor.u32 %s57, %s58
    %p60 = scmp.eq.s32.totalorder %s59, 0
    %s62 = sadd.s32 %s61, 1
    %s63 = scalar_select %p60, %s61, %s62
    %p66 = pneg %p60
    %p67 = scmp.eq.s32.totalorder %s11, 2
    %p68 = por %p66, %p67
    %p69 = scmp.ne.s32.totalorder %s61, %s64
    %p70 = scmp.eq.s32.totalorder %s11, 0
    %p71 = por %p69, %p70
    %p72 = scmp.ne.s32.totalorder %s61, %s64
    %p73 = scmp.eq.s32.totalorder %s16, 2
    %p74 = por %p72, %p73
    %p75 = scmp.ne.s32.totalorder %s64, %s65
    %p76 = scmp.eq.s32.totalorder %s16, 0
    %p77 = por %p75, %p76
    %p78 = scmp.ne.s32.totalorder %s64, %s65
    %p79 = scmp.eq.s32.totalorder %s17, 2
    %p80 = por %p78, %p79
    %p82 = scmp.ne.s32.totalorder %s65, %s81
    %p83 = scmp.eq.s32.totalorder %s17, 0
    %p84 = por %p82, %p83
    %s85 = ssub.s32 %s19, %s26
    %p86 = scmp.eq.s32.totalorder %s85, 0
    %s88 = sadd.s32 %s87, 1
    %s89 = scalar_select %p86, %s87, %s88
    %p92 = pneg %p86
    %p93 = scmp.eq.s32.totalorder %s11, 2
    %p94 = por %p92, %p93
    %p95 = scmp.ne.s32.totalorder %s87, %s90
    %p96 = scmp.eq.s32.totalorder %s11, 0
    %p97 = por %p95, %p96
    %p98 = scmp.ne.s32.totalorder %s87, %s90
    %p99 = scmp.eq.s32.totalorder %s16, 2
    %p100 = por %p98, %p99
    %p101 = scmp.ne.s32.totalorder %s90, %s91
    %p102 = scmp.eq.s32.totalorder %s16, 0
    %p103 = por %p101, %p102
    %p104 = scmp.ne.s32.totalorder %s90, %s91
    %p105 = scmp.eq.s32.totalorder %s17, 2
    %p106 = por %p104, %p105
    %p108 = scmp.ne.s32.totalorder %s91, %s107
    %p109 = scmp.eq.s32.totalorder %s17, 0
    %p110 = por %p108, %p109
    %s111 = ssub.s32 %s19, %s26
    %p112 = scmp.eq.s32.totalorder %s111, 0
    %s114 = sadd.s32 %s113, 1
    %s115 = scalar_select %p112, %s113, %s114
    %p118 = pneg %p112
    %p119 = scmp.eq.s32.totalorder %s11, 2
    %p120 = por %p118, %p119
    %p121 = scmp.ne.s32.totalorder %s113, %s116
    %p122 = scmp.eq.s32.totalorder %s11, 0
    %p123 = por %p121, %p122
    %p124 = scmp.ne.s32.totalorder %s113, %s116
    %p125 = scmp.eq.s32.totalorder %s16, 2
    %p126 = por %p124, %p125
    %p127 = scmp.ne.s32.totalorder %s116, %s117
    %p128 = scmp.eq.s32.totalorder %s16, 0
    %p129 = por %p127, %p128
    %p130 = scmp.ne.s32.totalorder %s116, %s117
    %p131 = scmp.eq.s32.totalorder %s17, 2
    %p132 = por %p130, %p131
    %p134 = scmp.ne.s32.totalorder %s117, %s133
    %p135 = scmp.eq.s32.totalorder %s17, 0
    %p136 = por %p134, %p135
    %s137 = ssub.s32 %s19, %s26
    %p138 = scmp.eq.s32.totalorder %s137, 0
    %s140 = sadd.s32 %s139, 1
    %s141 = scalar_select %p138, %s139, %s140
    %p144 = pneg %p138
    %p145 = scmp.eq.s32.totalorder %s11, 2
    %p146 = por %p144, %p145
    %p147 = scmp.ne.s32.totalorder %s139, %s142
    %p148 = scmp.eq.s32.totalorder %s11, 0
    %p149 = por %p147, %p148
    %p150 = scmp.ne.s32.totalorder %s139, %s142
    %p151 = scmp.eq.s32.totalorder %s16, 2
    %p152 = por %p150, %p151
    %p153 = scmp.ne.s32.totalorder %s142, %s143
    %p154 = scmp.eq.s32.totalorder %s16, 0
    %p155 = por %p153, %p154
    %p156 = scmp.ne.s32.totalorder %s142, %s143
    %p157 = scmp.eq.s32.totalorder %s17, 2
    %p158 = por %p156, %p157
    %p160 = scmp.ne.s32.totalorder %s143, %s159
    %p161 = scmp.eq.s32.totalorder %s17, 0
    %p162 = por %p160, %p161
    %s163 = ssub.s32 %s18, %s30
    %p164 = scmp.eq.s32.totalorder %s163, 0
    %s166 = sadd.s32 %s165, 1
    %s167 = scalar_select %p164, %s165, %s166
    %p170 = pneg %p164
    %p171 = scmp.eq.s32.totalorder %s11, 2
    %p172 = por %p170, %p171
    %p173 = scmp.ne.s32.totalorder %s165, %s168
    %p174 = scmp.eq.s32.totalorder %s11, 0
    %p175 = por %p173, %p174
    %p176 = scmp.ne.s32.totalorder %s165, %s168
    %p177 = scmp.eq.s32.totalorder %s16, 2
    %p178 = por %p176, %p177
    %p179 = scmp.ne.s32.totalorder %s168, %s169
    %p180 = scmp.eq.s32.totalorder %s16, 0
    %p181 = por %p179, %p180
    %p182 = scmp.ne.s32.totalorder %s168, %s169
    %p183 = scmp.eq.s32.totalorder %s17, 2
    %p184 = por %p182, %p183
    %p186 = scmp.ne.s32.totalorder %s169, %s185
    %p187 = scmp.eq.s32.totalorder %s17, 0
    %p188 = por %p186, %p187
    %p189 = scmp.le.s32.totalorder 1, %s11
    %p190 = scmp.lt.s32.totalorder %s11, 4
    %p191 = pnand %p189, %p190
    %p192 = pneg %p191
    // Predicated region
    $region9: #{decoder_layer_stack.1} parent=5 // pred_check
      _
    $region10: #{decoder_layer_stack.1} parent=5 // pred_check_branch
      %194 = sbr.rel (%p191) target = $region12
    $region11: #{decoder_layer_stack.1} parent=5 // pred_region
      %s195 = ssub.s32 %s11, 1
      // Predicated region
      $region13: #{decoder_layer_stack.1} parent=11 // pred_check
        %p196 = pneg %p49
      $region14: #{decoder_layer_stack.1} parent=11 // pred_check_branch
        %198 = sbr.rel (%p196) target = $region16
      $region15: #{decoder_layer_stack.1} parent=11 // pred_region
        %s199 = smul.u32 2, %s20
        %p200 = scmp.lt.s32.totalorder %s199, 1
        %s201 = scalar_select %p200, %s199, 1
        %s202 = smul.addr %s201, 8
        %s203 = scalar_lea.vmem %s0, %s202
        %s204 = smul.u32 2, %s20
      $region16: #{decoder_layer_stack.1} parent=11 // pred_fallthru
        _
    $region12: #{decoder_layer_stack.1} parent=5 // pred_fallthru
      _
    %p205 = scmp.lt.s32.totalorder %s11, 3
    // Predicated region
    $region17: #{decoder_layer_stack.1} parent=5 // pred_check
      %p206 = pneg %p205
    $region18: #{decoder_layer_stack.1} parent=5 // pred_check_branch
      %208 = sbr.rel (%p206) target = $region20
    $region19: #{decoder_layer_stack.1} parent=5 // pred_region
      // Predicated region
      $region21: #{decoder_layer_stack.1} parent=19 // pred_check
        %p209 = pneg %p71
      $region22: #{decoder_layer_stack.1} parent=19 // pred_check_branch
        %211 = sbr.rel (%p209) target = $region24
      $region23: #{decoder_layer_stack.1} parent=19 // pred_region
        %s212 = smul.u32 2, %s18
        %p213 = scmp.lt.s32.totalorder %s19, 2
        %s214 = scalar_select %p213, %s19, 2
        %p215 = scmp.lt.s32.totalorder %s212, 1
        %s216 = scalar_select %p215, %s212, 1
        %s217 = smul.addr %s214, 4
        %s218 = sadd.s32 %s216, %s217
        %s219 = smul.addr %s218, 8
        %s220 = scalar_lea.vmem %s1, %s219
        %s221 = smul.u32 2, %s18
      $region24: #{decoder_layer_stack.1} parent=19 // pred_fallthru
        _
      // Predicated region
      $region25: #{decoder_layer_stack.1} parent=19 // pred_check
        %p222 = pneg %p97
      $region26: #{decoder_layer_stack.1} parent=19 // pred_check_branch
        %224 = sbr.rel (%p222) target = $region28
      $region27: #{decoder_layer_stack.1} parent=19 // pred_region
        %p225 = scmp.lt.s32.totalorder %s19, 2
        %s226 = scalar_select %p225, %s19, 2
        %s227 = smul.addr %s226, 16
        %s228 = smul.addr %s227, 4
        %s229 = scalar_lea.vmem %s2, %s228
      $region28: #{decoder_layer_stack.1} parent=19 // pred_fallthru
        _
      // Predicated region
      $region29: #{decoder_layer_stack.1} parent=19 // pred_check
        %p230 = pneg %p123
      $region30: #{decoder_layer_stack.1} parent=19 // pred_check_branch
        %232 = sbr.rel (%p230) target = $region32
      $region31: #{decoder_layer_stack.1} parent=19 // pred_region
        %p233 = scmp.lt.s32.totalorder %s19, 2
        %s234 = scalar_select %p233, %s19, 2
        %s235 = smul.addr %s234, 16
        %s236 = smul.addr %s235, 4
        %s237 = scalar_lea.vmem %s3, %s236
      $region32: #{decoder_layer_stack.1} parent=19 // pred_fallthru
        _
      // Predicated region
      $region33: #{decoder_layer_stack.1} parent=19 // pred_check
        %p238 = pneg %p149
      $region34: #{decoder_layer_stack.1} parent=19 // pred_check_branch
        %240 = sbr.rel (%p238) target = $region36
      $region35: #{decoder_layer_stack.1} parent=19 // pred_region
        %p241 = scmp.lt.s32.totalorder %s19, 2
        %s242 = scalar_select %p241, %s19, 2
        %s243 = smul.addr %s242, 2
        %s244 = scalar_lea.vmem %s4, %s243
      $region36: #{decoder_layer_stack.1} parent=19 // pred_fallthru
        _
    $region20: #{decoder_layer_stack.1} parent=5 // pred_fallthru
      _
    %p245 = scmp.le.s32.totalorder 1, %s11
    %p246 = scmp.lt.s32.totalorder %s11, 4
    %p247 = pnand %p245, %p246
    %p248 = pneg %p247
    // Predicated region
    $region37: #{decoder_layer_stack.1} parent=5 // pred_check
      _
    $region38: #{decoder_layer_stack.1} parent=5 // pred_check_branch
      %250 = sbr.rel (%p247) target = $region40
    $region39: #{decoder_layer_stack.1} parent=5 // pred_region
      %s251 = ssub.s32 %s11, 1
      %s252 = smul.u32 2, %s20
      %p253 = scmp.lt.s32.totalorder %s252, 1
      %s254 = scalar_select %p253, %s252, 1
      %s255 = smul.addr %s254, 8
      %s256 = scalar_lea.vmem %s0, %s255
      %p257 = pneg %p49
      %p258 = pneg %p46
      %s259 = smul.u32 2, %s20
      %p260 = scmp.lt.s32.totalorder %s21, 2
      %s261 = scalar_select %p260, %s21, 2
      %p262 = scmp.lt.s32.totalorder %s259, 1
      %s263 = scalar_select %p262, %s259, 1
      %s264 = smul.addr %s261, 4
      %s265 = sadd.s32 %s263, %s264
      %s266 = smul.addr %s265, 8
      %s267 = scalar_lea.vmem %s1, %s266
      %p268 = pneg %p77
      %p269 = pneg %p74
      %p270 = scmp.lt.s32.totalorder %s21, 2
      %s271 = scalar_select %p270, %s21, 2
      %s272 = smul.addr %s271, 16
      %s273 = smul.addr %s272, 4
      %s274 = scalar_lea.vmem %s2, %s273
      %p275 = pneg %p103
      %p276 = pneg %p100
      %p277 = scmp.lt.s32.totalorder %s21, 2
      %s278 = scalar_select %p277, %s21, 2
      %s279 = smul.addr %s278, 16
      %s280 = smul.addr %s279, 4
      %s281 = scalar_lea.vmem %s3, %s280
      %p282 = pneg %p129
      %p283 = pneg %p126
      %p284 = scmp.lt.s32.totalorder %s21, 2
      %s285 = scalar_select %p284, %s21, 2
      %s286 = smul.addr %s285, 2
      %s287 = scalar_lea.vmem %s4, %s286
      %p288 = pneg %p155
      %p289 = pneg %p152
      %p290 = pneg %p181
      %p291 = pneg %p178
      %s292 = smul.u32 2, %s20
      %p293 = scmp.lt.s32.totalorder %s292, 1
      %s294 = scalar_select %p293, %s292, 1
      %s295 = smul.addr %s294, 8
      %s296 = scalar_lea.vmem %s5, %s295
      %s297 = smul.u32 2, %s20
      %p298 = scmp.lt.s32.totalorder %s297, 1
      %s299 = scalar_select %p298, %s297, 1
      %s300 = smul.addr %s299, 8
      %s301 = scalar_lea.vmem %s0, %s300
      %s302 = smul.u32 2, %s20
      %s303 = smul.u32 2, %s20
      %p304 = scmp.lt.s32.totalorder %s21, 2
      %s305 = scalar_select %p304, %s21, 2
      %p306 = scmp.lt.s32.totalorder %s303, 1
      %s307 = scalar_select %p306, %s303, 1
      %s308 = smul.addr %s305, 4
      %s309 = sadd.s32 %s307, %s308
      %s310 = smul.addr %s309, 8
      %s311 = scalar_lea.vmem %s1, %s310
      %s312 = smul.u32 2, %s20
      %p313 = scmp.lt.s32.totalorder %s21, 2
      %s314 = scalar_select %p313, %s21, 2
      %s315 = smul.addr %s314, 16
      %s316 = smul.addr %s315, 4
      %s317 = scalar_lea.vmem %s2, %s316
      %p318 = scmp.lt.s32.totalorder %s21, 2
      %s319 = scalar_select %p318, %s21, 2
      %s320 = smul.addr %s319, 16
      %s321 = smul.addr %s320, 4
      %s322 = scalar_lea.vmem %s3, %s321
      %p323 = scmp.lt.s32.totalorder %s21, 2
      %s324 = scalar_select %p323, %s21, 2
      %s325 = smul.addr %s324, 2
      %s326 = scalar_lea.vmem %s4, %s325
      %s327 = smul.u32 2, %s20
      %p328 = scmp.lt.s32.totalorder %s327, 1
      %s329 = scalar_select %p328, %s327, 1
      %s330 = smul.addr %s329, 8
      %s331 = scalar_lea.vmem %s5, %s330
      %s332 = smul.u32 2, %s20
      %p334 = scmp.eq.s32.totalorder %s21, 0
      // Predicated region
      $region41: #{decoder_layer_stack.1} parent=39 // pred_check
        %p335 = pneg %p334
      $region42: #{decoder_layer_stack.1} parent=39 // pred_check_branch
        %337 = sbr.rel (%p335) target = $region44
      $region43: #{decoder_layer_stack.1} parent=39 // pred_region
        %v338 = vld [vmem:[%s301] sm:$0xff]
        %v339 = vld [vmem:[%s301 + $0x8] sm:$0xff]
        %340 = vst [vmem:[%s331] sm:$0xff] %v338
        %341 = vst [vmem:[%s331 + $0x8] sm:$0xff] %v339
      $region44: #{decoder_layer_stack.1} parent=39 // pred_fallthru
        _
      %v342 = vld [vmem:[%s331] sm:$0xff]
      %v343 = vld [vmem:[%s331 + $0x8] sm:$0xff]
      %v344 = vld [vmem:[%s311] sm:$0xff]
      %v345 = vld [vmem:[%s311 + $0x8] sm:$0xff]
      %s346 = scalar_lea.vmem %s311, 16
      %v347 = vld [vmem:[%s346] sm:$0xff]
      %v348 = vld [vmem:[%s346 + $0x8] sm:$0xff]
      %v349 = vld [vmem:[%s326] sm:$0x1]
      %v350 = vld [vmem:[%s326 + $0x1] sm:$0x1]
      %v351 = vpack.c.bf16 %v343, %v342
      %v352 = vld [vmem:[%s317] sm:$0xf]
      %v353 = vld [vmem:[%s317 + $0x4] sm:$0xf]
      %v354 = vld [vmem:[%s317 + $0x8] sm:$0xf]
      %v355 = vld [vmem:[%s317 + $0xc] sm:$0xf]
      %v356 = vld [vmem:[%s317 + $0x10] sm:$0xf]
      %v357 = vld [vmem:[%s317 + $0x14] sm:$0xf]
      %v358 = vld [vmem:[%s317 + $0x18] sm:$0xf]
      %v359 = vld [vmem:[%s317 + $0x1c] sm:$0xf]
      %v360 = vld [vmem:[%s317 + $0x20] sm:$0xf]
      %v361 = vld [vmem:[%s317 + $0x24] sm:$0xf]
      %v362 = vld [vmem:[%s317 + $0x28] sm:$0xf]
      %v363 = vld [vmem:[%s317 + $0x2c] sm:$0xf]
      %v364 = vld [vmem:[%s317 + $0x30] sm:$0xf]
      %v365 = vld [vmem:[%s317 + $0x34] sm:$0xf]
      %v366 = vld [vmem:[%s317 + $0x38] sm:$0xf]
      %v367 = vld [vmem:[%s317 + $0x3c] sm:$0xf]
      %v368 = vlaneseq
      %v369 = vshrl.u32 %v368, 7
      %v370 = vsub.s32 0, %v369
      %v371 = vrot.slane %v349, %v370
      %v388 = vunpack.c.l.b16 %v352
      %v389 = vunpack.c.l.b16 %v353
      %v390 = vunpack.c.l.b16 %v354
      %v391 = vunpack.c.l.b16 %v355
      %v392 = vunpack.c.l.b16 %v356
      %v393 = vunpack.c.l.b16 %v357
      %v394 = vunpack.c.l.b16 %v358
      %v395 = vunpack.c.l.b16 %v359
      %v396 = vunpack.c.l.b16 %v360
      %v397 = vunpack.c.l.b16 %v361
      %v398 = vunpack.c.l.b16 %v362
      %v399 = vunpack.c.l.b16 %v363
      %v400 = vunpack.c.l.b16 %v364
      %v401 = vunpack.c.l.b16 %v365
      %v402 = vunpack.c.l.b16 %v366
      %v403 = vunpack.c.l.b16 %v367
      %v404 = vpack.c.b16 %v389, %v388
      %v405 = vpack.c.b16 %v391, %v390
      %v406 = vpack.c.b16 %v393, %v392
      %v407 = vpack.c.b16 %v395, %v394
      %v408 = vpack.c.b16 %v397, %v396
      %v409 = vpack.c.b16 %v399, %v398
      %v410 = vpack.c.b16 %v401, %v400
      %v411 = vpack.c.b16 %v403, %v402
      %420 = vmatprep.subr.bf16.mxu0 0
      %421 = vmatpush1.bf16.msra.mxu0 %v411
      %422 = vmatprep.subr.bf16.mxu0 0
      %423 = vmatpush1.bf16.msra.mxu0 %v410
      %424 = vmatprep.subr.bf16.mxu0 0
      %425 = vmatpush1.bf16.msra.mxu0 %v409
      %426 = vmatprep.subr.bf16.mxu0 0
      %427 = vmatpush1.bf16.msra.mxu0 %v408
      %428 = vmatprep.subr.bf16.mxu0 0
      %429 = vmatpush1.bf16.msra.mxu0 %v407
      %430 = vmatprep.subr.bf16.mxu0 0
      %431 = vmatpush1.bf16.msra.mxu0 %v406
      %432 = vmatprep.subr.bf16.mxu0 0
      %433 = vmatpush1.bf16.msra.mxu0 %v405
      %434 = vmatprep.subr.bf16.mxu0 0
      %435 = vmatpush1.bf16.msra.mxu0 %v404
      %436 = vmatprep.subr.bf16.mxu0 0
      %437 = vmatpush2.bf16.msra.mxu0 0
      %438 = vmatprep.subr.bf16.mxu0 0
      %439 = vmatpush2.bf16.msra.mxu0 0
      %440 = vmatprep.subr.bf16.mxu0 0
      %441 = vmatpush2.bf16.msra.mxu0 0
      %442 = vmatprep.subr.bf16.mxu0 0
      %443 = vmatpush2.bf16.msra.mxu0 0
      %444 = vmatprep.subr.bf16.mxu0 0
      %445 = vmatpush2.bf16.msra.mxu0 0
      %446 = vmatprep.subr.bf16.mxu0 0
      %447 = vmatpush2.bf16.msra.mxu0 0
      %448 = vmatprep.subr.bf16.mxu0 0
      %449 = vmatpush2.bf16.msra.mxu0 0
      %450 = vmatprep.subr.bf16.mxu0 0
      %451 = vmatpush2.bf16.msra.mxu0 0
      %452 = vmatprep.mubr.bf16.mxu0 0
      %453 = vmatmul.mubr.bf16.gmra.mxu0 %v351
      %v454 = vpop.f32.mrf.mxu0
      %v455 = vadd.f32 %v371, %v454
      %v456 = vpop.f32.mrf.mxu0
      %v457 = vpop.f32.mrf.mxu0
      %v458 = vadd.f32 %v371, %v457
      %v459 = vpop.f32.mrf.mxu0
      %460 = vdwg.mxu0
      %v461 = vmul.f32 %v455, %v455
      %v462 = vmul.f32 %v458, %v458
      %v463 = vmul.f32 %v455, %v461
      %v464 = vmul.f32 %v458, %v462
      %v465 = vmul.f32 %v463, 0.044715
      %v466 = vmul.f32 %v464, 0.044715
      %v467 = vadd.f32 %v455, %v465
      %v468 = vadd.f32 %v458, %v466
      %v469 = vmul.f32 %v467, 0.7978846
      %v470 = vmul.f32 %v468, 0.7978846
      %v471 = vtanh.pop %v469
      %v472 = vtanh.pop %v470
      %v473 = vadd.f32 %v471, 1.0
      %v474 = vadd.f32 %v472, 1.0
      %v475 = vmul.f32 %v473, 0.5
      %v476 = vmul.f32 %v474, 0.5
      %v477 = vmul.f32 %v455, %v475
      %v478 = vmul.f32 %v458, %v476
      %v479 = vadd.f32 %v344, 1.0
      %v480 = vadd.f32 %v345, 1.0
      %v481 = vmul.f32 %v477, %v479
      %v482 = vmul.f32 %v478, %v480
      %v483 = vadd.f32 %v481, %v347
      %v484 = vadd.f32 %v482, %v348
      %v485 = vpack.c.bf16 %v484, %v483
      %v486 = vld [vmem:[%s322] sm:$0xf]
      %v487 = vld [vmem:[%s322 + $0x4] sm:$0xf]
      %v488 = vld [vmem:[%s322 + $0x8] sm:$0xf]
      %v489 = vld [vmem:[%s322 + $0xc] sm:$0xf]
      %v490 = vld [vmem:[%s322 + $0x10] sm:$0xf]
      %v491 = vld [vmem:[%s322 + $0x14] sm:$0xf]
      %v492 = vld [vmem:[%s322 + $0x18] sm:$0xf]
      %v493 = vld [vmem:[%s322 + $0x1c] sm:$0xf]
      %v494 = vld [vmem:[%s322 + $0x20] sm:$0xf]
      %v495 = vld [vmem:[%s322 + $0x24] sm:$0xf]
      %v496 = vld [vmem:[%s322 + $0x28] sm:$0xf]
      %v497 = vld [vmem:[%s322 + $0x2c] sm:$0xf]
      %v498 = vld [vmem:[%s322 + $0x30] sm:$0xf]
      %v499 = vld [vmem:[%s322 + $0x34] sm:$0xf]
      %v500 = vld [vmem:[%s322 + $0x38] sm:$0xf]
      %v501 = vld [vmem:[%s322 + $0x3c] sm:$0xf]
      %v502 = vlaneseq
      %v503 = vshrl.u32 %v502, 7
      %v504 = vsub.s32 0, %v503
      %v505 = vrot.slane %v350, %v504
      %v522 = vunpack.c.l.b16 %v486
      %v523 = vunpack.c.l.b16 %v487
      %v524 = vunpack.c.l.b16 %v488
      %v525 = vunpack.c.l.b16 %v489
      %v526 = vunpack.c.l.b16 %v490
      %v527 = vunpack.c.l.b16 %v491
      %v528 = vunpack.c.l.b16 %v492
      %v529 = vunpack.c.l.b16 %v493
      %v530 = vunpack.c.l.b16 %v494
      %v531 = vunpack.c.l.b16 %v495
      %v532 = vunpack.c.l.b16 %v496
      %v533 = vunpack.c.l.b16 %v497
      %v534 = vunpack.c.l.b16 %v498
      %v535 = vunpack.c.l.b16 %v499
      %v536 = vunpack.c.l.b16 %v500
      %v537 = vunpack.c.l.b16 %v501
      %v538 = vpack.c.b16 %v523, %v522
      %v539 = vpack.c.b16 %v525, %v524
      %v540 = vpack.c.b16 %v527, %v526
      %v541 = vpack.c.b16 %v529, %v528
      %v542 = vpack.c.b16 %v531, %v530
      %v543 = vpack.c.b16 %v533, %v532
      %v544 = vpack.c.b16 %v535, %v534
      %v545 = vpack.c.b16 %v537, %v536
      %554 = vmatprep.subr.bf16.mxu0 0
      %555 = vmatpush1.bf16.msra.mxu0 %v545
      %556 = vmatprep.subr.bf16.mxu0 0
      %557 = vmatpush1.bf16.msra.mxu0 %v544
      %558 = vmatprep.subr.bf16.mxu0 0
      %559 = vmatpush1.bf16.msra.mxu0 %v543
      %560 = vmatprep.subr.bf16.mxu0 0
      %561 = vmatpush1.bf16.msra.mxu0 %v542
      %562 = vmatprep.subr.bf16.mxu0 0
      %563 = vmatpush1.bf16.msra.mxu0 %v541
      %564 = vmatprep.subr.bf16.mxu0 0
      %565 = vmatpush1.bf16.msra.mxu0 %v540
      %566 = vmatprep.subr.bf16.mxu0 0
      %567 = vmatpush1.bf16.msra.mxu0 %v539
      %568 = vmatprep.subr.bf16.mxu0 0
      %569 = vmatpush1.bf16.msra.mxu0 %v538
      %570 = vmatprep.subr.bf16.mxu0 0
      %571 = vmatpush2.bf16.msra.mxu0 0
      %572 = vmatprep.subr.bf16.mxu0 0
      %573 = vmatpush2.bf16.msra.mxu0 0
      %574 = vmatprep.subr.bf16.mxu0 0
      %575 = vmatpush2.bf16.msra.mxu0 0
      %576 = vmatprep.subr.bf16.mxu0 0
      %577 = vmatpush2.bf16.msra.mxu0 0
      %578 = vmatprep.subr.bf16.mxu0 0
      %579 = vmatpush2.bf16.msra.mxu0 0
      %580 = vmatprep.subr.bf16.mxu0 0
      %581 = vmatpush2.bf16.msra.mxu0 0
      %582 = vmatprep.subr.bf16.mxu0 0
      %583 = vmatpush2.bf16.msra.mxu0 0
      %584 = vmatprep.subr.bf16.mxu0 0
      %585 = vmatpush2.bf16.msra.mxu0 0
      %586 = vmatprep.mubr.bf16.mxu0 0
      %587 = vmatmul.mubr.bf16.gmra.mxu0 %v485
      %v588 = vpop.f32.mrf.mxu0
      %v589 = vadd.f32 %v505, %v588
      %v590 = vpop.f32.mrf.mxu0
      %v591 = vpop.f32.mrf.mxu0
      %v592 = vadd.f32 %v505, %v591
      %v593 = vpop.f32.mrf.mxu0
      %594 = vdwg.mxu0
      %v595 = vadd.f32 %v342, %v589
      %v596 = vadd.f32 %v343, %v592
      %597 = vst [vmem:[%s331] sm:$0xff] %v595
      %598 = vst [vmem:[%s331 + $0x8] sm:$0xff] %v596
      %s599 = smul.u32 2, %s20
      %p600 = scmp.lt.s32.totalorder %s599, 1
      %s601 = scalar_select %p600, %s599, 1
      %s602 = smul.addr %s601, 8
      %s603 = scalar_lea.vmem %s5, %s602
      // Predicated region
      $region45: #{decoder_layer_stack.1} parent=39 // pred_check
        %p604 = pneg %p178
      $region46: #{decoder_layer_stack.1} parent=39 // pred_check_branch
        %606 = sbr.rel (%p604) target = $region48
      $region47: #{decoder_layer_stack.1} parent=39 // pred_region
        %s607 = smul.u32 2, %s20
      $region48: #{decoder_layer_stack.1} parent=39 // pred_fallthru
        _
      // Predicated region
      $region49: #{decoder_layer_stack.1} parent=39 // pred_check
        %p608 = pneg %p178
      $region50: #{decoder_layer_stack.1} parent=39 // pred_check_branch
        %610 = sbr.rel (%p608) target = $region52
      $region51: #{decoder_layer_stack.1} parent=39 // pred_region
        %s611 = smul.u32 2, %s20
        %p612 = scmp.lt.s32.totalorder %s611, 1
        %s613 = scalar_select %p612, %s611, 1
        %s614 = smul.addr %s613, 8
        %s615 = scalar_lea.vmem %s5, %s614
      $region52: #{decoder_layer_stack.1} parent=39 // pred_fallthru
        _
    $region40: #{decoder_layer_stack.1} parent=5 // pred_fallthru
      _
    %p616 = scmp.le.s32.totalorder 2, %s11
    // Predicated region
    $region53: #{decoder_layer_stack.1} parent=5 // pred_check
      %p617 = pneg %p616
    $region54: #{decoder_layer_stack.1} parent=5 // pred_check_branch
      %619 = sbr.rel (%p617) target = $region56
    $region55: #{decoder_layer_stack.1} parent=5 // pred_region
      %s620 = ssub.s32 %s11, 2
    $region56: #{decoder_layer_stack.1} parent=5 // pred_fallthru
      _
  $region6: #{decoder_layer_stack.1} parent=0 // loop_footer
    %s15 = sadd.s32 1, %s11
  $region7: #{decoder_layer_stack.1} parent=0 // loop_footer_branch
    %10 = sbr.rel target = $region3
  $region8: #{decoder_layer_stack.1} parent=0 // loop_exit
    _

</llo_original>
